<compile_context>
chip_gen: v7x
topology: tpu7x:2x2x1
jax: 0.10.0
libtpu: 0.0.40
codegen_flags: <defaults>
</compile_context>

<pallas_src>
import functools
import math

import jax
import jax.numpy as jnp
from jax.experimental import pallas as pl
from jax.experimental.pallas import tpu as pltpu


# ---------------------------------------------------------------------------
# in-kernel helpers
# ---------------------------------------------------------------------------

def _dot_nt(a, b):
    """(M, K) x (N, K) -> (M, N) on the MXU with f32 accumulation."""
    return jax.lax.dot_general(
        a, b,
        dimension_numbers=(((1,), (1,)), ((), ())),
        preferred_element_type=jnp.float32)


def _rel_shift(bd_full, seq_len):
    """XLNet rel_shift.

    bd_full[i, p] is the position score of query i against relative distance
    (seq_len - p).  Entry (i, j) of the shifted result must correspond to
    distance i - j, i.e. column j + seq_len - i of bd_full.  A lane rotation
    with a per-sublane stride (XLU, off the VALU/MXU critical path) realizes
    the shift:  rolled[i, j] = bd_full[i, (j - (seq_len + i)) % 2S]
                             = bd_full[i, j + seq_len - i]  for j < seq_len.
    """
    rolled = pltpu.roll(bd_full, seq_len, axis=1, stride=1, stride_axis=0)
    return rolled[:, :seq_len]


# ---------------------------------------------------------------------------
# XLNet encoder layer kernel
# ---------------------------------------------------------------------------

def _xlnet_layer_kernel(h_ref, mask_ref, r_ref,
                        wq_ref, wk_ref, wv_ref, wo_ref,
                        rwb_ref, rrb_ref,
                        ln1g_ref, ln1b_ref,
                        w1_ref, b1_ref, w2_ref, b2_ref,
                        ln2g_ref, ln2b_ref,
                        out_ref, *, n_head, d_head, seq_len, ln_eps):
    S, NH, DH = seq_len, n_head, d_head

    h = h_ref[...]                              # (S, Dm) f32 residual path
    mask = mask_ref[...]                        # (1, S); 1 = keep, 0 = pad
    neg = (1.0 - mask) * 1e30                   # XLNet: score - 1e30 * attn_mask

    h_bf = h.astype(jnp.bfloat16)               # bf16 operands, f32 accumulation
    q = jnp.dot(h_bf, wq_ref[...], preferred_element_type=jnp.float32)
    k = jnp.dot(h_bf, wk_ref[...], preferred_element_type=jnp.float32)
    v = jnp.dot(h_bf, wv_ref[...], preferred_element_type=jnp.float32)

    # Hoisted out of the head loop: bias adds, 1/sqrt(d_head) folded into q,
    # and the bf16 casts (one op each over the full (S, NH*DH) tensor).
    scale = 1.0 / math.sqrt(DH)
    q_rw = ((q + rwb_ref[...]) * scale).astype(jnp.bfloat16)
    q_rr = ((q + rrb_ref[...]) * scale).astype(jnp.bfloat16)
    k_bf = k.astype(jnp.bfloat16)
    v_bf = v.astype(jnp.bfloat16)
    r_bf = r_ref[...]                           # (2S, NH*DH) bf16 rel-pos keys

    # Per-head attention.  NH is small and each iteration is 3 MXU matmuls +
    # a softmax, so a static unroll keeps everything 2-D / lane-dense and
    # avoids (S, NH*DH) <-> (NH, S, DH) relayouts.  Per-head context vectors
    # are concatenated and the output projection is applied once, fused over
    # all heads.
    ctx = []
    for n in range(NH):
        sl = slice(n * DH, (n + 1) * DH)
        ac = _dot_nt(q_rw[:, sl], k_bf[:, sl])                     # (S, S)
        bd = _rel_shift(_dot_nt(q_rr[:, sl], r_bf[:, sl]), S)      # (S, S)
        s = ac + bd - neg
        m = jnp.max(s, axis=-1, keepdims=True)
        e = jnp.exp(s - m)
        p = e * pl.reciprocal(jnp.sum(e, axis=-1, keepdims=True), approx=True)
        ctx.append(jnp.dot(p.astype(jnp.bfloat16), v_bf[:, sl],
                           preferred_element_type=jnp.float32))    # (S, DH)
    ctx_all = jnp.concatenate(ctx, axis=-1).astype(jnp.bfloat16)   # (S, NH*DH)
    attn = jnp.dot(ctx_all, wo_ref[...], preferred_element_type=jnp.float32)

    # post-attention residual + LayerNorm (XLNet is post-LN), in f32
    x1 = attn + h
    mu1 = jnp.mean(x1, axis=-1, keepdims=True)
    var1 = jnp.mean(jnp.square(x1 - mu1), axis=-1, keepdims=True)
    y1 = (x1 - mu1) * jax.lax.rsqrt(var1 + ln_eps) * ln1g_ref[...] + ln1b_ref[...]

    # position-wise feed-forward (bf16 matmuls, f32 elementwise)
    f1 = jnp.dot(y1.astype(jnp.bfloat16), w1_ref[...],
                 preferred_element_type=jnp.float32) + b1_ref[...]
    # TODO(synk): HF XLNet uses exact erf GELU; tanh approximation kept for robust Mosaic lowering.
    f1 = jax.nn.gelu(f1, approximate=True)
    f2 = jnp.dot(f1.astype(jnp.bfloat16), w2_ref[...],
                 preferred_element_type=jnp.float32) + b2_ref[...]
    x2 = f2 + y1
    mu2 = jnp.mean(x2, axis=-1, keepdims=True)
    var2 = jnp.mean(jnp.square(x2 - mu2), axis=-1, keepdims=True)
    out = (x2 - mu2) * jax.lax.rsqrt(var2 + ln_eps) * ln2g_ref[...] + ln2b_ref[...]

    out_ref[...] = out.astype(out_ref.dtype)


def xlnet_layer(h, mask, r_bf, p):
    """One XLNet encoder layer; grid over batch, full sequence per block."""
    B, S, Dm = h.shape
    NH, DH = p["rwb"].shape
    Dff = p["w1"].shape[1]
    bf = jnp.bfloat16

    def fixed(shape):
        # Layer weights: constant block index -> Mosaic's pipeliner fetches the
        # block once and reuses it across grid steps (no per-batch re-DMA).
        nz = len(shape)
        return pl.BlockSpec(shape, lambda b, _nz=nz: (0,) * _nz)

    kern = functools.partial(_xlnet_layer_kernel,
                             n_head=NH, d_head=DH, seq_len=S, ln_eps=1e-12)
    return pl.pallas_call(
        kern,
        out_shape=jax.ShapeDtypeStruct((B, S, Dm), jnp.float32),
        grid=(B,),
        in_specs=[
            pl.BlockSpec((None, S, Dm), lambda b: (b, 0, 0)),   # h   (batch squeezed)
            pl.BlockSpec((None, 1, S), lambda b: (b, 0, 0)),    # mask
            fixed((2 * S, NH * DH)),                            # R rel-pos keys (bf16)
            fixed((Dm, NH * DH)),                               # wq (bf16)
            fixed((Dm, NH * DH)),                               # wk (bf16)
            fixed((Dm, NH * DH)),                               # wv (bf16)
            fixed((NH * DH, Dm)),                               # wo (bf16)
            fixed((1, NH * DH)), fixed((1, NH * DH)),           # r_w_bias, r_r_bias
            fixed((1, Dm)), fixed((1, Dm)),                     # ln1 gamma/beta
            fixed((Dm, Dff)), fixed((1, Dff)),                  # ff layer_1 w (bf16) / b
            fixed((Dff, Dm)), fixed((1, Dm)),                   # ff layer_2 w (bf16) / b
            fixed((1, Dm)), fixed((1, Dm)),                     # ln2 gamma/beta
        ],
        out_specs=pl.BlockSpec((None, S, Dm), lambda b: (b, 0, 0)),
        compiler_params=pltpu.CompilerParams(
            dimension_semantics=("parallel",),
            vmem_limit_bytes=48 * 1024 * 1024),
    )(h, mask, r_bf,
      p["wq"].astype(bf), p["wk"].astype(bf), p["wv"].astype(bf), p["wo"].astype(bf),
      p["rwb"].reshape(1, NH * DH), p["rrb"].reshape(1, NH * DH),
      p["ln1g"], p["ln1b"],
      p["w1"].astype(bf), p["b1"], p["w2"].astype(bf), p["b2"],
      p["ln2g"], p["ln2b"])


# ---------------------------------------------------------------------------
# parameter / position setup glue (outside the kernel)
# ---------------------------------------------------------------------------

def rel_pos_emb(S, Dm):
    """Sinusoidal embeddings of relative distances S, S-1, ..., -S+1 (row p <-> S - p)."""
    pos = jnp.arange(S, -S, -1, dtype=jnp.float32)                        # (2S,)
    inv_freq = 1.0 / (10000.0 ** (jnp.arange(0, Dm, 2, dtype=jnp.float32) / Dm))
    sinusoid = pos[:, None] * inv_freq[None, :]                           # (2S, Dm/2)
    return jnp.concatenate([jnp.sin(sinusoid), jnp.cos(sinusoid)], axis=-1)  # (2S, Dm)


def init_params(key, n_layers, vocab, Dm, NH, DH, Dff):
    keys = jax.random.split(key, 1 + n_layers)
    word_emb = jax.random.normal(keys[0], (vocab, Dm), jnp.float32)
    layers = []
    for l in range(n_layers):
        ks = jax.random.split(keys[1 + l], 15)
        nrm = lambda k, s, sc=0.05: jax.random.normal(k, s, jnp.float32) * sc
        layers.append(dict(
            wq=nrm(ks[0], (Dm, NH * DH)), wk=nrm(ks[1], (Dm, NH * DH)),
            wv=nrm(ks[2], (Dm, NH * DH)), wr=nrm(ks[3], (Dm, NH * DH)),
            wo=nrm(ks[4], (NH * DH, Dm)),
            rwb=nrm(ks[5], (NH, DH), 0.5), rrb=nrm(ks[6], (NH, DH), 0.5),
            ln1g=1.0 + nrm(ks[7], (1, Dm), 0.2), ln1b=nrm(ks[8], (1, Dm), 0.2),
            w1=nrm(ks[9], (Dm, Dff)), b1=nrm(ks[10], (1, Dff)),
            w2=nrm(ks[11], (Dff, Dm)), b2=nrm(ks[12], (1, Dm)),
            ln2g=1.0 + nrm(ks[13], (1, Dm), 0.2), ln2b=nrm(ks[14], (1, Dm), 0.2),
        ))
    return word_emb, layers


def xlnet_encoder_forward(token_ids, attn_masks, word_emb, layers, NH, DH):
    """Mirror of XLNetEncoder.forward: returns (cont_reps, token_ids)."""
    B, S = token_ids.shape
    Dm = word_emb.shape[1]
    h = jnp.take(word_emb, token_ids, axis=0)                  # embedding lookup (glue)
    mask = attn_masks.astype(jnp.float32)[:, None, :]          # (B, 1, S)
    pos = rel_pos_emb(S, Dm)                                   # shared across layers
    for p in layers:
        r_bf = jnp.dot(pos, p["wr"]).astype(jnp.bfloat16)      # (2S, NH*DH)
        h = xlnet_layer(h, mask, r_bf, p)
    return h, token_ids


# ---------------------------------------------------------------------------
# pure-JAX reference (independent rel_shift via explicit gather) + checks
# ---------------------------------------------------------------------------

def _layer_norm_ref(x, g, b, eps):
    mu = jnp.mean(x, axis=-1, keepdims=True)
    var = jnp.mean(jnp.square(x - mu), axis=-1, keepdims=True)
    return (x - mu) * jax.lax.rsqrt(var + eps) * g + b


def xlnet_forward_ref(token_ids, attn_masks, word_emb, layers, NH, DH):
    B, S = token_ids.shape
    Dm = word_emb.shape[1]
    h = word_emb[token_ids]
    scale = 1.0 / math.sqrt(DH)
    neg = (1.0 - attn_masks.astype(jnp.float32))[:, None, None, :] * 1e30
    pos = rel_pos_emb(S, Dm)
    ridx = S - (jnp.arange(S)[:, None] - jnp.arange(S)[None, :])        # (S, S)
    for p in layers:
        q = (h @ p["wq"]).reshape(B, S, NH, DH)
        k = (h @ p["wk"]).reshape(B, S, NH, DH)
        v = (h @ p["wv"]).reshape(B, S, NH, DH)
        r = (pos @ p["wr"]).reshape(2 * S, NH, DH)
        ac = jnp.einsum("bind,bjnd->bnij", q + p["rwb"], k)
        bd_all = jnp.einsum("bind,pnd->bnip", q + p["rrb"], r)          # (B,NH,S,2S)
        bd = jnp.take_along_axis(bd_all, jnp.broadcast_to(ridx, (B, NH, S, S)), axis=-1)
        s = (ac + bd) * scale - neg
        prob = jax.nn.softmax(s, axis=-1)
        ctx = jnp.einsum("bnij,bjnd->bind", prob, v).reshape(B, S, NH * DH)
        y1 = _layer_norm_ref(ctx @ p["wo"] + h, p["ln1g"], p["ln1b"], 1e-12)
        f = jax.nn.gelu(y1 @ p["w1"] + p["b1"], approximate=True)
        h = _layer_norm_ref(f @ p["w2"] + p["b2"] + y1, p["ln2g"], p["ln2b"], 1e-12)
    return h


def _rel_shift_check_kernel(x_ref, o_ref, *, seq_len):
    o_ref[...] = _rel_shift(x_ref[...], seq_len)


def _check_rel_shift(S):
    """Validates the strided-roll rel_shift against an explicit gather."""
    x = jax.random.normal(jax.random.PRNGKey(1), (S, 2 * S), jnp.float32)
    got = pl.pallas_call(
        functools.partial(_rel_shift_check_kernel, seq_len=S),
        out_shape=jax.ShapeDtypeStruct((S, S), jnp.float32))(x)
    idx = S - (jnp.arange(S)[:, None] - jnp.arange(S)[None, :])
    want = jnp.take_along_axis(x, idx, axis=1)
    assert bool(jnp.allclose(got, want)), "rel_shift (strided pltpu.roll) mismatch"


# ---------------------------------------------------------------------------

if __name__ == "__main__":
    # small, lane-dense XLNet-like config (all minor dims are multiples of 128)
    B, S, Dm, NH, DH, Dff, VOCAB, LAYERS = 2, 128, 128, 4, 32, 256, 64, 2

    key = jax.random.PRNGKey(0)
    kp, kt = jax.random.split(key)
    word_emb, layers = init_params(kp, LAYERS, VOCAB, Dm, NH, DH, Dff)

    # stand-in for XLNet_input(): token ids + attention mask (tokenization untranslatable)
    token_ids = jax.random.randint(kt, (B, S), 1, VOCAB, dtype=jnp.int32)
    attn_masks = jnp.ones((B, S), jnp.int32).at[1, S - 32:].set(0)   # pad tail of sentence 1
    token_ids = token_ids * attn_masks                               # pad token id = 0

    _check_rel_shift(S)

    cont_reps, tok_out = xlnet_encoder_forward(
        token_ids, attn_masks, word_emb, layers, NH, DH)
    cont_reps = jax.block_until_ready(cont_reps)

    ref = xlnet_forward_ref(token_ids, attn_masks, word_emb, layers, NH, DH)
    rel_err = jnp.linalg.norm(cont_reps - ref) / jnp.linalg.norm(ref)

    assert cont_reps.shape == (B, S, Dm)
    assert cont_reps.dtype == jnp.float32
    assert bool(jnp.all(jnp.isfinite(cont_reps)))
    assert tok_out.shape == (B, S)
    assert float(rel_err) < 8e-2, f"kernel vs reference mismatch: rel_err={float(rel_err):.4f}"
    print("KERNEL_OK")
</pallas_src>

<mosaic_0001>
module attributes {stable_mosaic.version = 11 : i64} {
  func.func @_rel_shift_check_kernel(%arg0: memref<128x256xf32, #tpu.memory_space<vmem>>, %arg1: memref<128x128xf32, #tpu.memory_space<vmem>>) attributes {dimension_semantics = [], scalar_prefetch = 0 : i64, scratch_operands = 0 : i64, tpu.core_type = #tpu.core_type<tc>} {
    %c0 = arith.constant 0 : index
    %c0_0 = arith.constant 0 : index
    %0 = vector.load %arg0[%c0, %c0_0] : memref<128x256xf32, #tpu.memory_space<vmem>>, vector<128x256xf32>
    %c128_i32 = arith.constant 128 : i32
    %1 = tpu.dynamic_rotate %0 by %c128_i32 dim 1 {stride = 1 : si32, stride_dimension = 0 : si32} : vector<128x256xf32>, i32 -> vector<128x256xf32>
    %2 = vector.extract_strided_slice %1 {offsets = [0, 0], sizes = [128, 128], strides = [1, 1]} : vector<128x256xf32> to vector<128x128xf32>
    %c0_1 = arith.constant 0 : index
    %c0_2 = arith.constant 0 : index
    %3 = vector.load %arg1[%c0_1, %c0_2] : memref<128x128xf32, #tpu.memory_space<vmem>>, vector<128x128xf32>
    tpu.vector_store %arg1[%c0_1, %c0_2], %2 {strides = array<i32>} : memref<128x128xf32, #tpu.memory_space<vmem>>, vector<128x128xf32>,
    return
  }
}

</mosaic_0001>

<llo_original>
// kernel: tpu_custom_call.1
$region0: #{tpu_custom_call.1}
  #allocation0 [shape = 'u32[]', space=smem, size = 0x4, offset = 0x4, fixed_abs, tag = 'smem constant byte address 0x4 - core index']
  #allocation1 [shape = 'u32[144,128]{1,0:T(1,128)}', space=vmem, size = 0x12000, scoped, tag = 'internal scratch']
  %s0 = inlined_call_operand.hbm [shape: f32[128,256], index: 0, kind: input, shape index: {}]
  %s1 = inlined_call_operand.hbm [shape: f32[128,128], index: 1, kind: output, shape index: {}]
  %s2 = sld [smem:[#allocation0]]
  $region18: #{tpu_custom_call.1} parent=0
    _
  %s4 = ssub.s32 1, %s2
  %s5 = scalar_select 0, %s4, %s2
  $region1: #{tpu_custom_call.1} parent=0
    #allocation2 [shape = 'u8[131072]{0}', space=vmem, size = 0x20000, scoped, tag = 'input window, operand 0, single buffered']
    #allocation3 [shape = 's32[1]{0}', space=sflag, size = 0x4, scoped, tag = 'scoped memory for tpu_custom_call.1']
    #allocation4 [shape = 's32[1]{0}', space=sflag, size = 0x4, scoped, tag = 'scoped memory for tpu_custom_call.1']
    #allocation5 [shape = 'u8[65536]{0}', space=vmem, size = 0x10000, scoped, tag = 'output window, operand 0, single buffered']
    %6 = vsyncpa [#allocation3], 0
    %7 = vsyncpa [#allocation4], 0
    // Predicated region
    $region2: #{tpu_custom_call.1} parent=1 // pred_check
      _
    $region3: #{tpu_custom_call.1} parent=1 // pred_check_branch
      %9 = sbr.rel (0) target = $region5
    $region4: #{tpu_custom_call.1} parent=1 // pred_region
      %s11 = ssub.s32 4096, 4096
      %12 = vsyncadd [#allocation3], %s11
      %s13 = sshll.u32 [#allocation2], 4
      %s14 = int_to_ptr.vmem [resolvable:$true] %s13
      %19 = dma.hbm_to_vmem [thread:$0]  %s0, 4096, %s14, [#allocation3], 256, 256, 16
    $region5: #{tpu_custom_call.1} parent=1 // pred_fallthru
      _
    // Predicated region
    $region6: #{tpu_custom_call.1} parent=1 // pred_check
      _
    $region7: #{tpu_custom_call.1} parent=1 // pred_check_branch
      %21 = sbr.rel (0) target = $region9
    $region8: #{tpu_custom_call.1} parent=1 // pred_region
      %22 = dma.done [#allocation3], 4096
    $region9: #{tpu_custom_call.1} parent=1 // pred_fallthru
      _
    %v23 = vld [vmem:[#allocation2] sm:$0xff]
    %v24 = vld [vmem:[#allocation2 + $0x8] sm:$0xff]
    %v25 = vld [vmem:[#allocation2 + $0x10] sm:$0xff]
    %v26 = vld [vmem:[#allocation2 + $0x18] sm:$0xff]
    %v27 = vld [vmem:[#allocation2 + $0x20] sm:$0xff]
    %v28 = vld [vmem:[#allocation2 + $0x28] sm:$0xff]
    %v29 = vld [vmem:[#allocation2 + $0x30] sm:$0xff]
    %v30 = vld [vmem:[#allocation2 + $0x38] sm:$0xff]
    %v31 = vld [vmem:[#allocation2 + $0x40] sm:$0xff]
    %v32 = vld [vmem:[#allocation2 + $0x48] sm:$0xff]
    %v33 = vld [vmem:[#allocation2 + $0x50] sm:$0xff]
    %v34 = vld [vmem:[#allocation2 + $0x58] sm:$0xff]
    %v35 = vld [vmem:[#allocation2 + $0x60] sm:$0xff]
    %v36 = vld [vmem:[#allocation2 + $0x68] sm:$0xff]
    %v37 = vld [vmem:[#allocation2 + $0x70] sm:$0xff]
    %v38 = vld [vmem:[#allocation2 + $0x78] sm:$0xff]
    %v39 = vld [vmem:[#allocation2 + $0x80] sm:$0xff]
    %v40 = vld [vmem:[#allocation2 + $0x88] sm:$0xff]
    %v41 = vld [vmem:[#allocation2 + $0x90] sm:$0xff]
    %v42 = vld [vmem:[#allocation2 + $0x98] sm:$0xff]
    %v43 = vld [vmem:[#allocation2 + $0xa0] sm:$0xff]
    %v44 = vld [vmem:[#allocation2 + $0xa8] sm:$0xff]
    %v45 = vld [vmem:[#allocation2 + $0xb0] sm:$0xff]
    %v46 = vld [vmem:[#allocation2 + $0xb8] sm:$0xff]
    %v47 = vld [vmem:[#allocation2 + $0xc0] sm:$0xff]
    %v48 = vld [vmem:[#allocation2 + $0xc8] sm:$0xff]
    %v49 = vld [vmem:[#allocation2 + $0xd0] sm:$0xff]
    %v50 = vld [vmem:[#allocation2 + $0xd8] sm:$0xff]
    %v51 = vld [vmem:[#allocation2 + $0xe0] sm:$0xff]
    %v52 = vld [vmem:[#allocation2 + $0xe8] sm:$0xff]
    %v53 = vld [vmem:[#allocation2 + $0xf0] sm:$0xff]
    %v54 = vld [vmem:[#allocation2 + $0xf8] sm:$0xff]
    %56 = vrot.lane.b32.xlu0 %v23, 256
    %v57 = vpop.permute.xlu0 %56
    %59 = vrot.lane.b32.xlu0 %v24, 256
    %v60 = vpop.permute.xlu0 %59
    %v61 = vlaneseq
    %v62 = vshrl.u32 %v61, 7
    %v63 = vlaneseq
    %v64 = vand.u32 %v63, 127
    %vm65 = vcmp.lt.s32.totalorder %v64, %v62
    %v66 = vsel %vm65, %v57, %v60
    %s68 = sor.u32 256, 8
    %69 = vrot.lane.b32.xlu0 %v25, %s68
    %v70 = vpop.permute.xlu0 %69
    %s72 = sor.u32 256, 8
    %73 = vrot.lane.b32.xlu0 %v26, %s72
    %v74 = vpop.permute.xlu0 %73
    %v75 = vadd.s32 %v62, 8
    %vm76 = vcmp.lt.s32.totalorder %v64, %v75
    %v77 = vsel %vm76, %v70, %v74
    %s79 = sor.u32 256, 16
    %80 = vrot.lane.b32.xlu0 %v27, %s79
    %v81 = vpop.permute.xlu0 %80
    %s83 = sor.u32 256, 16
    %84 = vrot.lane.b32.xlu0 %v28, %s83
    %v85 = vpop.permute.xlu0 %84
    %v86 = vadd.s32 %v62, 16
    %vm87 = vcmp.lt.s32.totalorder %v64, %v86
    %v88 = vsel %vm87, %v81, %v85
    %s90 = sor.u32 256, 24
    %91 = vrot.lane.b32.xlu0 %v29, %s90
    %v92 = vpop.permute.xlu0 %91
    %s94 = sor.u32 256, 24
    %95 = vrot.lane.b32.xlu0 %v30, %s94
    %v96 = vpop.permute.xlu0 %95
    %v97 = vadd.s32 %v62, 24
    %vm98 = vcmp.lt.s32.totalorder %v64, %v97
    %v99 = vsel %vm98, %v92, %v96
    %s101 = sor.u32 256, 32
    %102 = vrot.lane.b32.xlu0 %v31, %s101
    %v103 = vpop.permute.xlu0 %102
    %s105 = sor.u32 256, 32
    %106 = vrot.lane.b32.xlu0 %v32, %s105
    %v107 = vpop.permute.xlu0 %106
    %v108 = vadd.s32 %v62, 32
    %vm109 = vcmp.lt.s32.totalorder %v64, %v108
    %v110 = vsel %vm109, %v103, %v107
    %s112 = sor.u32 256, 40
    %113 = vrot.lane.b32.xlu0 %v33, %s112
    %v114 = vpop.permute.xlu0 %113
    %s116 = sor.u32 256, 40
    %117 = vrot.lane.b32.xlu0 %v34, %s116
    %v118 = vpop.permute.xlu0 %117
    %v119 = vadd.s32 %v62, 40
    %vm120 = vcmp.lt.s32.totalorder %v64, %v119
    %v121 = vsel %vm120, %v114, %v118
    %s123 = sor.u32 256, 48
    %124 = vrot.lane.b32.xlu0 %v35, %s123
    %v125 = vpop.permute.xlu0 %124
    %s127 = sor.u32 256, 48
    %128 = vrot.lane.b32.xlu0 %v36, %s127
    %v129 = vpop.permute.xlu0 %128
    %v130 = vadd.s32 %v62, 48
    %vm131 = vcmp.lt.s32.totalorder %v64, %v130
    %v132 = vsel %vm131, %v125, %v129
    %s134 = sor.u32 256, 56
    %135 = vrot.lane.b32.xlu0 %v37, %s134
    %v136 = vpop.permute.xlu0 %135
    %s138 = sor.u32 256, 56
    %139 = vrot.lane.b32.xlu0 %v38, %s138
    %v140 = vpop.permute.xlu0 %139
    %v141 = vadd.s32 %v62, 56
    %vm142 = vcmp.lt.s32.totalorder %v64, %v141
    %v143 = vsel %vm142, %v136, %v140
    %s145 = sor.u32 256, 64
    %146 = vrot.lane.b32.xlu0 %v39, %s145
    %v147 = vpop.permute.xlu0 %146
    %s149 = sor.u32 256, 64
    %150 = vrot.lane.b32.xlu0 %v40, %s149
    %v151 = vpop.permute.xlu0 %150
    %v152 = vadd.s32 %v62, 64
    %vm153 = vcmp.lt.s32.totalorder %v64, %v152
    %v154 = vsel %vm153, %v147, %v151
    %s156 = sor.u32 256, 72
    %157 = vrot.lane.b32.xlu0 %v41, %s156
    %v158 = vpop.permute.xlu0 %157
    %s160 = sor.u32 256, 72
    %161 = vrot.lane.b32.xlu0 %v42, %s160
    %v162 = vpop.permute.xlu0 %161
    %v163 = vadd.s32 %v62, 72
    %vm164 = vcmp.lt.s32.totalorder %v64, %v163
    %v165 = vsel %vm164, %v158, %v162
    %s167 = sor.u32 256, 80
    %168 = vrot.lane.b32.xlu0 %v43, %s167
    %v169 = vpop.permute.xlu0 %168
    %s171 = sor.u32 256, 80
    %172 = vrot.lane.b32.xlu0 %v44, %s171
    %v173 = vpop.permute.xlu0 %172
    %v174 = vadd.s32 %v62, 80
    %vm175 = vcmp.lt.s32.totalorder %v64, %v174
    %v176 = vsel %vm175, %v169, %v173
    %s178 = sor.u32 256, 88
    %179 = vrot.lane.b32.xlu0 %v45, %s178
    %v180 = vpop.permute.xlu0 %179
    %s182 = sor.u32 256, 88
    %183 = vrot.lane.b32.xlu0 %v46, %s182
    %v184 = vpop.permute.xlu0 %183
    %v185 = vadd.s32 %v62, 88
    %vm186 = vcmp.lt.s32.totalorder %v64, %v185
    %v187 = vsel %vm186, %v180, %v184
    %s189 = sor.u32 256, 96
    %190 = vrot.lane.b32.xlu0 %v47, %s189
    %v191 = vpop.permute.xlu0 %190
    %s193 = sor.u32 256, 96
    %194 = vrot.lane.b32.xlu0 %v48, %s193
    %v195 = vpop.permute.xlu0 %194
    %v196 = vadd.s32 %v62, 96
    %vm197 = vcmp.lt.s32.totalorder %v64, %v196
    %v198 = vsel %vm197, %v191, %v195
    %s200 = sor.u32 256, 104
    %201 = vrot.lane.b32.xlu0 %v49, %s200
    %v202 = vpop.permute.xlu0 %201
    %s204 = sor.u32 256, 104
    %205 = vrot.lane.b32.xlu0 %v50, %s204
    %v206 = vpop.permute.xlu0 %205
    %v207 = vadd.s32 %v62, 104
    %vm208 = vcmp.lt.s32.totalorder %v64, %v207
    %v209 = vsel %vm208, %v202, %v206
    %s211 = sor.u32 256, 112
    %212 = vrot.lane.b32.xlu0 %v51, %s211
    %v213 = vpop.permute.xlu0 %212
    %s215 = sor.u32 256, 112
    %216 = vrot.lane.b32.xlu0 %v52, %s215
    %v217 = vpop.permute.xlu0 %216
    %v218 = vadd.s32 %v62, 112
    %vm219 = vcmp.lt.s32.totalorder %v64, %v218
    %v220 = vsel %vm219, %v213, %v217
    %s222 = sor.u32 256, 120
    %223 = vrot.lane.b32.xlu0 %v53, %s222
    %v224 = vpop.permute.xlu0 %223
    %s226 = sor.u32 256, 120
    %227 = vrot.lane.b32.xlu0 %v54, %s226
    %v228 = vpop.permute.xlu0 %227
    %v229 = vadd.s32 %v62, 120
    %vm230 = vcmp.lt.s32.totalorder %v64, %v229
    %v231 = vsel %vm230, %v224, %v228
    %232 = vst [vmem:[#allocation5] sm:$0xff] %v66
    %233 = vst [vmem:[#allocation5 + $0x8] sm:$0xff] %v77
    %234 = vst [vmem:[#allocation5 + $0x10] sm:$0xff] %v88
    %235 = vst [vmem:[#allocation5 + $0x18] sm:$0xff] %v99
    %236 = vst [vmem:[#allocation5 + $0x20] sm:$0xff] %v110
    %237 = vst [vmem:[#allocation5 + $0x28] sm:$0xff] %v121
    %238 = vst [vmem:[#allocation5 + $0x30] sm:$0xff] %v132
    %239 = vst [vmem:[#allocation5 + $0x38] sm:$0xff] %v143
    %240 = vst [vmem:[#allocation5 + $0x40] sm:$0xff] %v154
    %241 = vst [vmem:[#allocation5 + $0x48] sm:$0xff] %v165
    %242 = vst [vmem:[#allocation5 + $0x50] sm:$0xff] %v176
    %243 = vst [vmem:[#allocation5 + $0x58] sm:$0xff] %v187
    %244 = vst [vmem:[#allocation5 + $0x60] sm:$0xff] %v198
    %245 = vst [vmem:[#allocation5 + $0x68] sm:$0xff] %v209
    %246 = vst [vmem:[#allocation5 + $0x70] sm:$0xff] %v220
    %247 = vst [vmem:[#allocation5 + $0x78] sm:$0xff] %v231
    // Predicated region
    $region10: #{tpu_custom_call.1} parent=1 // pred_check
      _
    $region11: #{tpu_custom_call.1} parent=1 // pred_check_branch
      %249 = sbr.rel (0) target = $region13
    $region12: #{tpu_custom_call.1} parent=1 // pred_region
      %s251 = ssub.s32 2048, 2048
      %252 = vsyncadd [#allocation4], %s251
      %s253 = sshll.u32 [#allocation5], 4
      %s254 = int_to_ptr.vmem [resolvable:$true] %s253
      %259 = dma.vmem_to_hbm [thread:$0]  %s254, 2048, %s1, [#allocation4], 128, 128, 8
    $region13: #{tpu_custom_call.1} parent=1 // pred_fallthru
      _
    // Predicated region
    $region14: #{tpu_custom_call.1} parent=1 // pred_check
      _
    $region15: #{tpu_custom_call.1} parent=1 // pred_check_branch
      %261 = sbr.rel (0) target = $region17
    $region16: #{tpu_custom_call.1} parent=1 // pred_region
      %262 = dma.done [#allocation4], 2048
    $region17: #{tpu_custom_call.1} parent=1 // pred_fallthru
      _
    %263 = vsyncpa [#allocation3], 1
    %264 = vsyncpa [#allocation4], 1

</llo_original>
